<compile_context>
chip_gen: v7x
topology: tpu7x:2x2x1
jax: 0.10.0
libtpu: 0.0.40
codegen_flags: <defaults>
</compile_context>

<pallas_src>
import functools
import math

import jax
import jax.numpy as jnp
from jax.experimental import pallas as pl
from jax.experimental.pallas import tpu as pltpu


# --------------------------------------------------------------------------
# Pallas kernels
# --------------------------------------------------------------------------
def _mm_kernel(*refs, has_bias, relu, want_stats):
    """o = a @ b (+ bias) (+ relu); optional per-column sum / sum-of-squares."""
    i = 0
    a_ref = refs[i]; i += 1
    b_ref = refs[i]; i += 1
    bias_ref = None
    if has_bias:
        bias_ref = refs[i]; i += 1
    o_ref = refs[i]; i += 1

    y = jnp.dot(a_ref[...], b_ref[...], preferred_element_type=jnp.float32)
    if has_bias:
        y = y + bias_ref[...]
    if want_stats:  # BN statistics are taken pre-activation
        refs[i][...] = jnp.sum(y, axis=0, keepdims=True)
        refs[i + 1][...] = jnp.sum(y * y, axis=0, keepdims=True)
    if relu:
        y = jnp.maximum(y, 0.0)
    o_ref[...] = y.astype(o_ref.dtype)


def _pallas_matmul(a, b, bias=None, *, relu=False, want_stats=False):
    """a: (M, K) bf16, b: (K, N) bf16, bias: (1, N) f32 -> tuple of f32 outputs.

    Full-M / full-K blocks (no operand padding); N split into 2 lane-dense
    tiles when possible so the megacore / second TC can shard it.
    """
    M, K = a.shape
    _, N = b.shape
    if N >= 512 and N % 256 == 0:
        nj, tn = 2, N // 2
    else:
        nj, tn = 1, N

    in_specs = [pl.BlockSpec((M, K), lambda j: (0, 0)),
                pl.BlockSpec((K, tn), lambda j: (0, j))]
    args = [a, b]
    if bias is not None:
        in_specs.append(pl.BlockSpec((1, tn), lambda j: (0, j)))
        args.append(bias)

    out_shape = [jax.ShapeDtypeStruct((M, N), jnp.float32)]
    out_specs = [pl.BlockSpec((M, tn), lambda j: (0, j))]
    if want_stats:
        out_shape += [jax.ShapeDtypeStruct((1, N), jnp.float32)] * 2
        out_specs += [pl.BlockSpec((1, tn), lambda j: (0, j))] * 2

    return pl.pallas_call(
        functools.partial(_mm_kernel, has_bias=bias is not None,
                          relu=relu, want_stats=want_stats),
        out_shape=tuple(out_shape),
        grid=(nj,),
        in_specs=in_specs,
        out_specs=tuple(out_specs),
        compiler_params=pltpu.CompilerParams(
            dimension_semantics=("parallel",)),
    )(*args)


def _bn_kernel(*refs, has_res, res_affine, relu):
    """y = relu?(x*scale + shift [+ (res [*rs + rt])])."""
    x_ref, s_ref, t_ref = refs[0], refs[1], refs[2]
    i = 3
    y = x_ref[...] * s_ref[...] + t_ref[...]
    if has_res:
        r = refs[i][...]; i += 1
        if res_affine:
            r = r * refs[i][...] + refs[i + 1][...]; i += 2
        y = y + r
    if relu:
        y = jnp.maximum(y, 0.0)
    refs[i][...] = y


def _scale_shift(ssum, ssq, gamma, beta, count, eps=1e-5):
    mean = ssum / count
    var = jnp.maximum(ssq / count - mean * mean, 0.0)  # biased (training) var
    scale = gamma * jax.lax.rsqrt(var + eps)
    shift = beta - mean * scale
    return scale, shift


@functools.partial(jax.jit, static_argnames=("relu",))
def _bn_apply(x2, ssum, ssq, gamma, beta,
              res, res_ssum, res_ssq, res_gamma, res_beta, *, relu):
    """Training-mode BN apply (+optional residual with its own BN) + ReLU."""
    M, C = x2.shape
    scale, shift = _scale_shift(ssum, ssq, gamma, beta, M)
    full = pl.BlockSpec((M, C), lambda i: (0, 0))
    row = pl.BlockSpec((1, C), lambda i: (0, 0))
    args = [x2, scale, shift]
    in_specs = [full, row, row]
    has_res = res is not None
    res_affine = res_ssum is not None
    if has_res:
        args.append(res)
        in_specs.append(full)
        if res_affine:
            rs, rt = _scale_shift(res_ssum, res_ssq, res_gamma, res_beta, M)
            args += [rs, rt]
            in_specs += [row, row]
    return pl.pallas_call(
        functools.partial(_bn_kernel, has_res=has_res,
                          res_affine=res_affine, relu=relu),
        out_shape=jax.ShapeDtypeStruct((M, C), jnp.float32),
        grid=(1,),
        in_specs=in_specs,
        out_specs=full,
    )(*args)


def _head_kernel(*refs):
    """Fused fc_layers (3 Linear) + fc_meta (6 Linear) chain, weights in VMEM."""
    x_ref = refs[0]
    wb = refs[1:19]
    comb_ref, meta_ref = refs[19], refs[20]

    def lin(h, w_ref, b_ref, relu):
        y = jnp.dot(h, w_ref[...], preferred_element_type=jnp.float32) + b_ref[...]
        return jnp.maximum(y, 0.0) if relu else y

    h = x_ref[...]
    h = lin(h, wb[0], wb[1], True).astype(jnp.bfloat16)
    h = lin(h, wb[2], wb[3], True).astype(jnp.bfloat16)
    comb = lin(h, wb[4], wb[5], False)               # (B, 512) f32
    comb_ref[...] = comb
    m = comb
    for idx in range(6, 18, 2):                      # fc_meta, all with ReLU
        m = lin(m.astype(jnp.bfloat16), wb[idx], wb[idx + 1], True)
    meta_ref[...] = m


@jax.jit
def _head_forward(x, fc_w, fc_b, meta_w, meta_b):
    B = x.shape[0]
    xb = x.astype(jnp.bfloat16)
    args = [xb]
    in_specs = [pl.BlockSpec(xb.shape, lambda i: (0, 0))]
    for w, b in list(zip(fc_w, fc_b)) + list(zip(meta_w, meta_b)):
        args += [w, b]
        in_specs += [pl.BlockSpec(w.shape, lambda i: (0, 0)),
                     pl.BlockSpec(b.shape, lambda i: (0, 0))]
    return pl.pallas_call(
        _head_kernel,
        out_shape=(jax.ShapeDtypeStruct((B, 512), jnp.float32),
                   jax.ShapeDtypeStruct((B, 2), jnp.float32)),
        grid=(1,),
        in_specs=in_specs,
        out_specs=(pl.BlockSpec((B, 512), lambda i: (0, 0)),
                   pl.BlockSpec((B, 2), lambda i: (0, 0))),
        compiler_params=pltpu.CompilerParams(
            vmem_limit_bytes=32 * 1024 * 1024),   # safe on v5e/v6e/v7x
    )(*args)


# --------------------------------------------------------------------------
# Layer primitives (im2col / stats glue in XLA, matmuls in Pallas)
# --------------------------------------------------------------------------
@functools.partial(jax.jit,
                   static_argnames=("k", "stride", "padding", "want_stats"))
def _conv1d(x, w2, bias, *, k, stride, padding, want_stats):
    """x: (B, L, Cin) channels-last; w2: (k*Cin, Cout) bf16 (pre-transposed)."""
    B, L, Cin = x.shape
    Cout = w2.shape[1]
    xp = jnp.pad(x, ((0, 0), (padding, padding), (0, 0))) if padding else x
    Lout = (L + 2 * padding - k) // stride + 1
    # TODO(synk): im2col still materializes k shifted copies; a direct k-tap
    # accumulation via Element-offset BlockSpecs would avoid it, but the
    # activations here are tiny so it is not the bottleneck.
    cols = jnp.stack([xp[:, t:t + stride * Lout:stride, :] for t in range(k)],
                     axis=2)
    a = cols.reshape(B * Lout, k * Cin).astype(jnp.bfloat16)
    outs = _pallas_matmul(a, w2, bias, relu=False, want_stats=want_stats)
    y = outs[0].reshape(B, Lout, Cout)
    if want_stats:
        return y, outs[1], outs[2]
    return y


def maxpool1d(x, k=3, s=2, p=1):
    B, L, C = x.shape
    xp = jnp.pad(x, ((0, 0), (p, p), (0, 0)), constant_values=-jnp.inf)
    Lout = (L + 2 * p - k) // s + 1
    cols = jnp.stack([xp[:, i:i + s * Lout:s, :] for i in range(k)], axis=0)
    return jnp.max(cols, axis=0)


def adaptive_avgpool1d(x, out_size):
    """Matches torch AdaptiveAvgPool1d bin edges."""
    L = x.shape[1]
    outs = []
    for i in range(out_size):
        s = (i * L) // out_size
        e = -((-(i + 1) * L) // out_size)
        outs.append(jnp.mean(x[:, s:e, :], axis=1))
    return jnp.stack(outs, axis=1)                   # (B, out_size, C)


def basic_block_fwd(p, x, stride):
    y, s1, ss1 = _conv1d(x, p['conv1_w'], p['conv1_b'],
                         k=3, stride=stride, padding=1, want_stats=True)
    Bm, Lm, C = y.shape
    h = _bn_apply(y.reshape(Bm * Lm, C), s1, ss1, p['bn1_g'], p['bn1_b'],
                  None, None, None, None, None, relu=True).reshape(Bm, Lm, C)
    y2, s2, ss2 = _conv1d(h, p['conv2_w'], p['conv2_b'],
                          k=3, stride=1, padding=1, want_stats=True)
    if 'ds_w' in p:
        idn, sd, ssd = _conv1d(x, p['ds_w'], p['ds_b'],
                               k=1, stride=stride, padding=0, want_stats=True)
        out = _bn_apply(y2.reshape(Bm * Lm, C), s2, ss2,
                        p['bn2_g'], p['bn2_b'],
                        idn.reshape(Bm * Lm, C), sd, ssd,
                        p['ds_bn_g'], p['ds_bn_b'], relu=True)
    else:
        out = _bn_apply(y2.reshape(Bm * Lm, C), s2, ss2,
                        p['bn2_g'], p['bn2_b'],
                        x.reshape(Bm * Lm, C), None, None, None, None,
                        relu=True)
    return out.reshape(Bm, Lm, C)


# --------------------------------------------------------------------------
# Network forward passes
# --------------------------------------------------------------------------
def event_cnn_fwd(p, x):
    """EventDataResCNN; x: (B, L, 7) channels-last -> (B, 2560)."""
    y, s, ss = _conv1d(x, p['conv1_w'], None,
                       k=7, stride=2, padding=3, want_stats=True)
    B, L, C = y.shape
    x = _bn_apply(y.reshape(B * L, C), s, ss, p['bn1_g'], p['bn1_b'],
                  None, None, None, None, None, relu=True).reshape(B, L, C)
    x = maxpool1d(x, 3, 2, 1)
    for name, stride in (('layer1', 1), ('layer2', 2),
                         ('layer3', 2), ('layer4', 2)):
        blocks = p[name]
        x = basic_block_fwd(blocks[0], x, stride)
        for blk in blocks[1:]:
            x = basic_block_fwd(blk, x, 1)
    x = adaptive_avgpool1d(x, 5)                                  # (B, 5, 512)
    x = jnp.transpose(x, (0, 2, 1)).reshape(x.shape[0], -1)       # (B, 2560)
    return x


def deconv_fwd(p, x):
    """EventDataCNNResDeConv; x: (B, L, 2) -> (B, L, out_ch)."""
    y, s, ss = _conv1d(x, p['conv1_w'], None,
                       k=7, stride=1, padding=3, want_stats=True)
    B, L, C = y.shape
    x = _bn_apply(y.reshape(B * L, C), s, ss, p['bn1_g'], p['bn1_b'],
                  None, None, None, None, None, relu=True).reshape(B, L, C)
    for name in ('layer1', 'layer2', 'layer3', 'layer4'):
        for blk in p[name]:
            x = basic_block_fwd(blk, x, 1)
    x = _conv1d(x, p['conv2_w'], p['conv2_b'],
                k=1, stride=1, padding=0, want_stats=False)
    return x


def antenna_network_forward(params, event_data, meta_data, antenna_pos):
    """event_data: (B, 7, L) NCL; meta_data: (B, 12); antenna_pos: (B, 3)."""
    x = jnp.transpose(event_data, (0, 2, 1))                 # -> (B, L, 7)
    feat = event_cnn_fwd(params['event_cnn'], x)             # (B, 2560)
    combined = jnp.concatenate([feat, meta_data, antenna_pos], axis=1)
    combined_out, meta_out = _head_forward(
        combined, params['fc_w'], params['fc_b'],
        params['meta_w'], params['meta_b'])                  # (B,512), (B,2)
    ant = combined_out.reshape(-1, 2, 256)                   # torch (B, 2, 256)
    ant = jnp.transpose(ant, (0, 2, 1))                      # -> (B, 256, 2)
    ant = deconv_fwd(params['deconv'], ant)                  # (B, 256, out_ch)
    # torch does swapaxes(1, 2) on (B, out_ch, 256); channels-last is already
    # (B, 256, out_ch), i.e. the final layout.
    return meta_out, ant


# --------------------------------------------------------------------------
# Deterministic parameter construction (weights pre-transposed to matmul
# layout and cast to bf16 ONCE here; shapes follow the module __init__).
# --------------------------------------------------------------------------
class ParamGen:
    def __init__(self, key):
        self.key = key
        self.count = 0

    def _next(self):
        self.count += 1
        return jax.random.fold_in(self.key, self.count)

    def normal(self, shape, scale):
        return (scale * jax.random.normal(self._next(), shape)).astype(jnp.float32)


def conv_prep(pg, cout, cin, k, bias=True):
    # PyTorch layout (Cout, Cin, K) -> matmul layout (K*Cin, Cout), bf16.
    w = pg.normal((cout, cin, k), 1.0 / math.sqrt(cin * k))
    w2 = jnp.transpose(w, (2, 1, 0)).reshape(k * cin, cout).astype(jnp.bfloat16)
    b = pg.normal((1, cout), 0.02) if bias else None
    return w2, b


def bn_prep(c):
    return jnp.ones((1, c), jnp.float32), jnp.zeros((1, c), jnp.float32)


def linear_prep(pg, in_f, out_f):
    w = pg.normal((out_f, in_f), 1.0 / math.sqrt(in_f))
    return jnp.transpose(w).astype(jnp.bfloat16), pg.normal((1, out_f), 0.02)


def block_prep(pg, cin, cout, stride):
    p = {}
    p['conv1_w'], p['conv1_b'] = conv_prep(pg, cout, cin, 3)
    p['bn1_g'], p['bn1_b'] = bn_prep(cout)
    p['conv2_w'], p['conv2_b'] = conv_prep(pg, cout, cout, 3)
    p['bn2_g'], p['bn2_b'] = bn_prep(cout)
    if stride != 1 or cin != cout:
        p['ds_w'], p['ds_b'] = conv_prep(pg, cout, cin, 1)
        p['ds_bn_g'], p['ds_bn_b'] = bn_prep(cout)
    return p


def layer_prep(pg, cin, cout, blocks, stride):
    ps = [block_prep(pg, cin, cout, stride)]
    for _ in range(1, blocks):
        ps.append(block_prep(pg, cout, cout, 1))
    return ps


def make_params(key, output_channels):
    pg = ParamGen(key)
    event_cnn = {}
    event_cnn['conv1_w'], _ = conv_prep(pg, 64, 7, 7, bias=False)
    event_cnn['bn1_g'], event_cnn['bn1_b'] = bn_prep(64)
    event_cnn['layer1'] = layer_prep(pg, 64, 64, 2, 1)
    event_cnn['layer2'] = layer_prep(pg, 64, 128, 2, 2)
    event_cnn['layer3'] = layer_prep(pg, 128, 256, 2, 2)
    event_cnn['layer4'] = layer_prep(pg, 256, 512, 2, 2)

    fc_w, fc_b = [], []
    for i, o in [(2560 + 12 + 3, 1024), (1024, 1024), (1024, 512)]:
        w, b = linear_prep(pg, i, o)
        fc_w.append(w); fc_b.append(b)
    meta_w, meta_b = [], []
    for i, o in [(512, 256), (256, 128), (128, 64), (64, 32), (32, 16), (16, 2)]:
        w, b = linear_prep(pg, i, o)
        meta_w.append(w); meta_b.append(b)

    deconv = {}
    deconv['conv1_w'], _ = conv_prep(pg, 64, 2, 7, bias=False)
    deconv['bn1_g'], deconv['bn1_b'] = bn_prep(64)
    deconv['layer1'] = layer_prep(pg, 64, 64, 2, 1)
    deconv['layer2'] = layer_prep(pg, 64, 128, 2, 1)
    deconv['layer3'] = layer_prep(pg, 128, 256, 2, 1)
    deconv['layer4'] = layer_prep(pg, 256, 512, 2, 1)
    deconv['conv2_w'], deconv['conv2_b'] = conv_prep(
        pg, output_channels, 512, 1, bias=True)

    return {'event_cnn': event_cnn, 'fc_w': fc_w, 'fc_b': fc_b,
            'meta_w': meta_w, 'meta_b': meta_b, 'deconv': deconv}


# --------------------------------------------------------------------------
if __name__ == "__main__":
    key = jax.random.PRNGKey(0)
    output_channels = 3
    params = make_params(jax.random.fold_in(key, 1), output_channels)

    B, L = 2, 160   # L=160 -> after strides the CNN length hits 5 for avgpool(5)
    k1, k2, k3 = jax.random.split(jax.random.fold_in(key, 2), 3)
    event_data = jax.random.normal(k1, (B, 7, L), jnp.float32)    # NCL like torch
    meta_data = jax.random.normal(k2, (B, 12), jnp.float32)
    antenna_pos = jax.random.normal(k3, (B, 3), jnp.float32)

    meta_out, ant_out = antenna_network_forward(
        params, event_data, meta_data, antenna_pos)
    jax.block_until_ready((meta_out, ant_out))

    assert meta_out.shape == (B, 2), meta_out.shape
    assert ant_out.shape == (B, 256, output_channels), ant_out.shape
    assert jnp.all(jnp.isfinite(meta_out)) and jnp.all(jnp.isfinite(ant_out))
    print("KERNEL_OK")
</pallas_src>

<mosaic_0001>
module attributes {stable_mosaic.version = 11 : i64} {
  func.func @_mm_kernel(%arg0: i32, %arg1: memref<160x49xbf16, #tpu.memory_space<vmem>>, %arg2: memref<49x64xbf16, #tpu.memory_space<vmem>>, %arg3: memref<160x64xf32, #tpu.memory_space<vmem>>, %arg4: memref<1x64xf32, #tpu.memory_space<vmem>>, %arg5: memref<1x64xf32, #tpu.memory_space<vmem>>) attributes {dimension_semantics = [#tpu.dimension_semantics<parallel>], iteration_bounds = array<i64: 1>, scalar_prefetch = 0 : i64, scratch_operands = 0 : i64, tpu.core_type = #tpu.core_type<tc>, window_params = [{pipeline_mode = #tpu.pipeline_mode<synchronous>, transform_indices = @transform_0, window_bounds = array<i64: 160, 49>}, {transform_indices = @transform_1, window_bounds = array<i64: 49, 64>}, {transform_indices = @transform_2, window_bounds = array<i64: 160, 64>}, {transform_indices = @transform_3, window_bounds = array<i64: 1, 64>}, {transform_indices = @transform_4, window_bounds = array<i64: 1, 64>}]} {
    %c0 = arith.constant 0 : index
    %c0_0 = arith.constant 0 : index
    %0 = vector.load %arg1[%c0, %c0_0] : memref<160x49xbf16, #tpu.memory_space<vmem>>, vector<160x49xbf16>
    %c0_1 = arith.constant 0 : index
    %c0_2 = arith.constant 0 : index
    %1 = vector.load %arg2[%c0_1, %c0_2] : memref<49x64xbf16, #tpu.memory_space<vmem>>, vector<49x64xbf16>
    %cst = arith.constant dense<0.000000e+00> : vector<160x64xf32>
    %2 = tpu.matmul %0, %1, %cst {dimension_numbers = #tpu.dot_dimension_numbers<[1], [0], [0], [1], [0, 0, 1, 1], [], []>} : vector<160x49xbf16>, vector<49x64xbf16>, vector<160x64xf32> -> vector<160x64xf32>
    %cst_3 = arith.constant dense<0.000000e+00> : vector<64xf32>
    %3 = vector.multi_reduction <add>, %2, %cst_3 [0] : vector<160x64xf32> to vector<64xf32>
    %4 = vector.shape_cast %3 : vector<64xf32> to vector<1x64xf32>
    %c0_4 = arith.constant 0 : index
    %c0_5 = arith.constant 0 : index
    %5 = vector.load %arg4[%c0_4, %c0_5] : memref<1x64xf32, #tpu.memory_space<vmem>>, vector<1x64xf32>
    tpu.vector_store %arg4[%c0_4, %c0_5], %4 {strides = array<i32>} : memref<1x64xf32, #tpu.memory_space<vmem>>, vector<1x64xf32>,
    %6 = arith.mulf %2, %2 : vector<160x64xf32>
    %cst_6 = arith.constant dense<0.000000e+00> : vector<64xf32>
    %7 = vector.multi_reduction <add>, %6, %cst_6 [0] : vector<160x64xf32> to vector<64xf32>
    %8 = vector.shape_cast %7 : vector<64xf32> to vector<1x64xf32>
    %c0_7 = arith.constant 0 : index
    %c0_8 = arith.constant 0 : index
    %9 = vector.load %arg5[%c0_7, %c0_8] : memref<1x64xf32, #tpu.memory_space<vmem>>, vector<1x64xf32>
    tpu.vector_store %arg5[%c0_7, %c0_8], %8 {strides = array<i32>} : memref<1x64xf32, #tpu.memory_space<vmem>>, vector<1x64xf32>,
    %c0_9 = arith.constant 0 : index
    %c0_10 = arith.constant 0 : index
    %10 = vector.load %arg3[%c0_9, %c0_10] : memref<160x64xf32, #tpu.memory_space<vmem>>, vector<160x64xf32>
    tpu.vector_store %arg3[%c0_9, %c0_10], %2 {strides = array<i32>} : memref<160x64xf32, #tpu.memory_space<vmem>>, vector<160x64xf32>,
    return
  }
  func.func @transform_0(%arg0: i32) -> (i32, i32) {
    %c0_i32 = arith.constant 0 : i32
    %c0_i32_0 = arith.constant 0 : i32
    %c0_i32_1 = arith.constant 0 : i32
    return %c0_i32, %c0_i32_0 : i32, i32
  }
  func.func @transform_1(%arg0: i32) -> (i32, i32) {
    %c0_i32 = arith.constant 0 : i32
    %c0_i32_0 = arith.constant 0 : i32
    return %c0_i32, %arg0 : i32, i32
  }
  func.func @transform_2(%arg0: i32) -> (i32, i32) {
    %c0_i32 = arith.constant 0 : i32
    %c0_i32_0 = arith.constant 0 : i32
    return %c0_i32, %arg0 : i32, i32
  }
  func.func @transform_3(%arg0: i32) -> (i32, i32) {
    %c0_i32 = arith.constant 0 : i32
    %c0_i32_0 = arith.constant 0 : i32
    return %c0_i32, %arg0 : i32, i32
  }
  func.func @transform_4(%arg0: i32) -> (i32, i32) {
    %c0_i32 = arith.constant 0 : i32
    %c0_i32_0 = arith.constant 0 : i32
    return %c0_i32, %arg0 : i32, i32
  }
}

</mosaic_0001>

<llo_original>
// kernel: _conv1d.1
$region0: #{_conv1d.1}
  #allocation0 [shape = 'u32[]', space=smem, size = 0x4, offset = 0x4, fixed_abs, tag = 'smem constant byte address 0x4 - core index']
  #allocation1 [shape = 'u32[144,128]{1,0:T(1,128)}', space=vmem, size = 0x12000, scoped, tag = 'internal scratch']
  %s0 = inlined_call_operand.vmem [shape: bf16[160,49], index: 0, kind: input, shape index: {}]
  %s1 = inlined_call_operand.vmem [shape: bf16[49,64], index: 1, kind: input, shape index: {}]
  %s2 = inlined_call_operand.vmem [shape: f32[160,64], index: 2, kind: output, shape index: {0}]
  %s3 = inlined_call_operand.hbm [shape: f32[1,64], index: 3, kind: output, shape index: {1}]
  %s4 = inlined_call_operand.hbm [shape: f32[1,64], index: 4, kind: output, shape index: {2}]
  %5 = xla_tuple %s2, %s3, %s4
  %s6 = sld [smem:[#allocation0]]
  $region34: #{_conv1d.1} parent=0
    _
  %s8 = ssub.s32 1, %s6
  %s9 = scalar_select 0, %s8, %s6
  $region1: #{_conv1d.1} parent=0
    #allocation2 [shape = 'u8[512]{0}', space=vmem, size = 0x400, scoped, tag = 'output window, operand 1, single buffered']
    #allocation3 [shape = 's32[1]{0}', space=sflag, size = 0x4, scoped, tag = 'scoped memory for _conv1d.1']
    #allocation4 [shape = 'u8[512]{0}', space=vmem, size = 0x400, scoped, tag = 'output window, operand 2, single buffered']
    #allocation5 [shape = 's32[1]{0}', space=sflag, size = 0x4, scoped, tag = 'scoped memory for _conv1d.1']
    %10 = vsyncpa [#allocation3], 0
    %11 = vsyncpa [#allocation5], 0
    // Predicated region
    $region2: #{_conv1d.1} parent=1 // pred_check
      _
    $region3: #{_conv1d.1} parent=1 // pred_check_branch
      %13 = sbr.rel (0) target = $region5
    $region4: #{_conv1d.1} parent=1 // pred_region
      _
    $region5: #{_conv1d.1} parent=1 // pred_fallthru
      _
    // Predicated region
    $region6: #{_conv1d.1} parent=1 // pred_check
      _
    $region7: #{_conv1d.1} parent=1 // pred_check_branch
      %15 = sbr.rel (0) target = $region9
    $region8: #{_conv1d.1} parent=1 // pred_region
      _
    $region9: #{_conv1d.1} parent=1 // pred_fallthru
      _
    %v17 = vld [vmem:[%s0] sm:$0xf]
    %v18 = vld [vmem:[%s0 + $0x4] sm:$0xf]
    %v19 = vld [vmem:[%s0 + $0x8] sm:$0xf]
    %v20 = vld [vmem:[%s0 + $0xc] sm:$0xf]
    %v21 = vld [vmem:[%s0 + $0x10] sm:$0xf]
    %v22 = vld [vmem:[%s0 + $0x14] sm:$0xf]
    %v23 = vld [vmem:[%s0 + $0x18] sm:$0xf]
    %v24 = vld [vmem:[%s0 + $0x1c] sm:$0xf]
    %v25 = vld [vmem:[%s0 + $0x20] sm:$0xf]
    %v26 = vld [vmem:[%s0 + $0x24] sm:$0xf]
    %v27 = vld [vmem:[%s0 + $0x28] sm:$0xf]
    %v28 = vld [vmem:[%s0 + $0x2c] sm:$0xf]
    %v29 = vld [vmem:[%s0 + $0x30] sm:$0xf]
    %v30 = vld [vmem:[%s0 + $0x34] sm:$0xf]
    %v31 = vld [vmem:[%s0 + $0x38] sm:$0xf]
    %v32 = vld [vmem:[%s0 + $0x3c] sm:$0xf]
    %v33 = vld [vmem:[%s0 + $0x40] sm:$0xf]
    %v34 = vld [vmem:[%s0 + $0x44] sm:$0xf]
    %v35 = vld [vmem:[%s0 + $0x48] sm:$0xf]
    %v36 = vld [vmem:[%s0 + $0x4c] sm:$0xf]
    %v37 = vld [vmem:[%s1] sm:$0xf]
    %v38 = vld [vmem:[%s1 + $0x4] sm:$0xf]
    %v39 = vld [vmem:[%s1 + $0x8] sm:$0xf]
    %v40 = vld [vmem:[%s1 + $0xc] sm:$0xf]
    %v41 = vld [vmem:[%s1 + $0x10] sm:$0xf]
    %v42 = vld [vmem:[%s1 + $0x14] sm:$0xf]
    %v43 = vld [vmem:[%s1 + $0x18] sm:$0x1]
    %v64 = vunpack.c.l.b16 %v17
    %v65 = vunpack.c.l.b16 %v18
    %v66 = vunpack.c.l.b16 %v19
    %v67 = vunpack.c.l.b16 %v20
    %v68 = vunpack.c.l.b16 %v21
    %v69 = vunpack.c.l.b16 %v22
    %v70 = vunpack.c.l.b16 %v23
    %v71 = vunpack.c.l.b16 %v24
    %v72 = vunpack.c.l.b16 %v25
    %v73 = vunpack.c.l.b16 %v26
    %v74 = vunpack.c.l.b16 %v27
    %v75 = vunpack.c.l.b16 %v28
    %v76 = vunpack.c.l.b16 %v29
    %v77 = vunpack.c.l.b16 %v30
    %v78 = vunpack.c.l.b16 %v31
    %v79 = vunpack.c.l.b16 %v32
    %v80 = vunpack.c.l.b16 %v33
    %v81 = vunpack.c.l.b16 %v34
    %v82 = vunpack.c.l.b16 %v35
    %v83 = vunpack.c.l.b16 %v36
    %v84 = vpack.c.b16 %v65, %v64
    %v85 = vpack.c.b16 %v67, %v66
    %v86 = vpack.c.b16 %v69, %v68
    %v87 = vpack.c.b16 %v71, %v70
    %v88 = vpack.c.b16 %v73, %v72
    %v89 = vpack.c.b16 %v75, %v74
    %v90 = vpack.c.b16 %v77, %v76
    %v91 = vpack.c.b16 %v79, %v78
    %v92 = vpack.c.b16 %v81, %v80
    %v93 = vpack.c.b16 %v83, %v82
    %v101 = vunpack.c.l.b16 %v37
    %v102 = vunpack.c.l.b16 %v38
    %v103 = vunpack.c.l.b16 %v39
    %v104 = vunpack.c.l.b16 %v40
    %v105 = vunpack.c.l.b16 %v41
    %v106 = vunpack.c.l.b16 %v42
    %v107 = vunpack.c.l.b16 %v43
    %v108 = vpack.c.b16 %v102, %v101
    %v109 = vpack.c.b16 %v104, %v103
    %v110 = vpack.c.b16 %v106, %v105
    %v111 = vpack.c.b16 %v107, %v107
    %vm115 = vcmask 400384
    %v117 = vsel %vm115, %v84, 0
    %v120 = vsel %vm115, %v85, 0
    %v123 = vsel %vm115, %v86, 0
    %v126 = vsel %vm115, %v87, 0
    %v129 = vsel %vm115, %v88, 0
    %v132 = vsel %vm115, %v89, 0
    %v135 = vsel %vm115, %v90, 0
    %v138 = vsel %vm115, %v91, 0
    %v141 = vsel %vm115, %v92, 0
    %v144 = vsel %vm115, %v93, 0
    %vm146 = vcmask 1040384
    %v147 = vsel 0, 4294967295, 65535
    %v148 = vsel %vm146, %v147, 0
    %v150 = vand.u32 %v111, %v148
    %152 = vmatprep.subr.bf16.mxu0 0
    %153 = vmatpush1.bf16.msra.mxu0 %v108
    %154 = vmatprep.subr.bf16.mxu0 0
    %155 = vmatpush1.bf16.msra.mxu0 %v109
    %156 = vmatprep.subr.bf16.mxu0 0
    %157 = vmatpush1.bf16.msra.mxu0 %v110
    %158 = vmatprep.subr.bf16.mxu0 0
    %159 = vmatpush1.bf16.msra.mxu0 %v150
    %160 = vmatprep.subr.bf16.mxu0 0
    %161 = vmatpush1.bf16.msra.mxu0 0
    %162 = vmatprep.subr.bf16.mxu0 0
    %163 = vmatpush1.bf16.msra.mxu0 0
    %164 = vmatprep.subr.bf16.mxu0 0
    %165 = vmatpush1.bf16.msra.mxu0 0
    %166 = vmatprep.subr.bf16.mxu0 0
    %167 = vmatpush1.bf16.msra.mxu0 0
    %168 = vmatprep.subr.bf16.mxu0 0
    %169 = vmatpush1.bf16.msra.mxu0 0
    %170 = vmatprep.subr.bf16.mxu0 0
    %171 = vmatpush1.bf16.msra.mxu0 0
    %172 = vmatprep.subr.bf16.mxu0 0
    %173 = vmatpush1.bf16.msra.mxu0 0
    %174 = vmatprep.subr.bf16.mxu0 0
    %175 = vmatpush1.bf16.msra.mxu0 0
    %176 = vmatprep.subr.bf16.mxu0 0
    %177 = vmatpush1.bf16.msra.mxu0 0
    %178 = vmatprep.subr.bf16.mxu0 0
    %179 = vmatpush1.bf16.msra.mxu0 0
    %180 = vmatprep.subr.bf16.mxu0 0
    %181 = vmatpush1.bf16.msra.mxu0 0
    %182 = vmatprep.subr.bf16.mxu0 0
    %183 = vmatpush1.bf16.msra.mxu0 0
    %184 = vmatprep.mubr.bf16.mxu0 0
    %185 = vmatmul.mubr.bf16.gmra.mrb[0].mxu0 %v117
    %v186 = vpop.f32.mrb[0].mxu0
    %v187 = vadd.f32 0.0, %v186
    %v188 = vpop.f32.mrb[0].mxu0
    %v189 = vpop.f32.mrb[0].mxu0
    %v190 = vadd.f32 0.0, %v189
    %v191 = vpop.f32.mrb[0].mxu0
    %192 = vmatprep.mubr.bf16.mxu0 0
    %193 = vmatmul.mubr.bf16.gmra.mrb[0].mxu0 %v120
    %v194 = vpop.f32.mrb[0].mxu0
    %v195 = vadd.f32 0.0, %v194
    %v196 = vpop.f32.mrb[0].mxu0
    %v197 = vpop.f32.mrb[0].mxu0
    %v198 = vadd.f32 0.0, %v197
    %v199 = vpop.f32.mrb[0].mxu0
    %200 = vmatprep.mubr.bf16.mxu0 0
    %201 = vmatmul.mubr.bf16.gmra.mrb[0].mxu0 %v123
    %v202 = vpop.f32.mrb[0].mxu0
    %v203 = vadd.f32 0.0, %v202
    %v204 = vpop.f32.mrb[0].mxu0
    %v205 = vpop.f32.mrb[0].mxu0
    %v206 = vadd.f32 0.0, %v205
    %v207 = vpop.f32.mrb[0].mxu0
    %208 = vmatprep.mubr.bf16.mxu0 0
    %209 = vmatmul.mubr.bf16.gmra.mrb[0].mxu0 %v126
    %v210 = vpop.f32.mrb[0].mxu0
    %v211 = vadd.f32 0.0, %v210
    %v212 = vpop.f32.mrb[0].mxu0
    %v213 = vpop.f32.mrb[0].mxu0
    %v214 = vadd.f32 0.0, %v213
    %v215 = vpop.f32.mrb[0].mxu0
    %216 = vmatprep.mubr.bf16.mxu0 0
    %217 = vmatmul.mubr.bf16.gmra.mrb[0].mxu0 %v129
    %v218 = vpop.f32.mrb[0].mxu0
    %v219 = vadd.f32 0.0, %v218
    %v220 = vpop.f32.mrb[0].mxu0
    %v221 = vpop.f32.mrb[0].mxu0
    %v222 = vadd.f32 0.0, %v221
    %v223 = vpop.f32.mrb[0].mxu0
    %224 = vmatprep.mubr.bf16.mxu0 0
    %225 = vmatmul.mubr.bf16.gmra.mrb[0].mxu0 %v132
    %v226 = vpop.f32.mrb[0].mxu0
    %v227 = vadd.f32 0.0, %v226
    %v228 = vpop.f32.mrb[0].mxu0
    %v229 = vpop.f32.mrb[0].mxu0
    %v230 = vadd.f32 0.0, %v229
    %v231 = vpop.f32.mrb[0].mxu0
    %232 = vmatprep.mubr.bf16.mxu0 0
    %233 = vmatmul.mubr.bf16.gmra.mrb[0].mxu0 %v135
    %v234 = vpop.f32.mrb[0].mxu0
    %v235 = vadd.f32 0.0, %v234
    %v236 = vpop.f32.mrb[0].mxu0
    %v237 = vpop.f32.mrb[0].mxu0
    %v238 = vadd.f32 0.0, %v237
    %v239 = vpop.f32.mrb[0].mxu0
    %240 = vmatprep.mubr.bf16.mxu0 0
    %241 = vmatmul.mubr.bf16.gmra.mrb[0].mxu0 %v138
    %v242 = vpop.f32.mrb[0].mxu0
    %v243 = vadd.f32 0.0, %v242
    %v244 = vpop.f32.mrb[0].mxu0
    %v245 = vpop.f32.mrb[0].mxu0
    %v246 = vadd.f32 0.0, %v245
    %v247 = vpop.f32.mrb[0].mxu0
    %248 = vmatprep.mubr.bf16.mxu0 0
    %249 = vmatmul.mubr.bf16.gmra.mrb[0].mxu0 %v141
    %v250 = vpop.f32.mrb[0].mxu0
    %v251 = vadd.f32 0.0, %v250
    %v252 = vpop.f32.mrb[0].mxu0
    %v253 = vpop.f32.mrb[0].mxu0
    %v254 = vadd.f32 0.0, %v253
    %v255 = vpop.f32.mrb[0].mxu0
    %256 = vmatprep.mubr.bf16.mxu0 0
    %257 = vmatmul.mubr.bf16.gmra.mrb[0].mxu0 %v144
    %v258 = vpop.f32.mrb[0].mxu0
    %v259 = vadd.f32 0.0, %v258
    %v260 = vpop.f32.mrb[0].mxu0
    %v261 = vpop.f32.mrb[0].mxu0
    %v262 = vadd.f32 0.0, %v261
    %v263 = vpop.f32.mrb[0].mxu0
    %264 = vdwg.mxu0
    %vm265 = vcmask 523264
    %v266 = vsel %vm265, %v187, 0.0
    %v267 = vsel %vm265, %v190, 0.0
    %v268 = vadd.f32 %v266, %v267
    %v269 = vsel %vm265, %v195, 0.0
    %v270 = vadd.f32 %v268, %v269
    %v271 = vsel %vm265, %v198, 0.0
    %v272 = vadd.f32 %v270, %v271
    %v273 = vsel %vm265, %v203, 0.0
    %v274 = vadd.f32 %v272, %v273
    %v275 = vsel %vm265, %v206, 0.0
    %v276 = vadd.f32 %v274, %v275
    %v277 = vsel %vm265, %v211, 0.0
    %v278 = vadd.f32 %v276, %v277
    %v279 = vsel %vm265, %v214, 0.0
    %v280 = vadd.f32 %v278, %v279
    %v281 = vsel %vm265, %v219, 0.0
    %v282 = vadd.f32 %v280, %v281
    %v283 = vsel %vm265, %v222, 0.0
    %v284 = vadd.f32 %v282, %v283
    %v285 = vsel %vm265, %v227, 0.0
    %v286 = vadd.f32 %v284, %v285
    %v287 = vsel %vm265, %v230, 0.0
    %v288 = vadd.f32 %v286, %v287
    %v289 = vsel %vm265, %v235, 0.0
    %v290 = vadd.f32 %v288, %v289
    %v291 = vsel %vm265, %v238, 0.0
    %v292 = vadd.f32 %v290, %v291
    %v293 = vsel %vm265, %v243, 0.0
    %v294 = vadd.f32 %v292, %v293
    %v295 = vsel %vm265, %v246, 0.0
    %v296 = vadd.f32 %v294, %v295
    %v297 = vsel %vm265, %v251, 0.0
    %v298 = vadd.f32 %v296, %v297
    %v299 = vsel %vm265, %v254, 0.0
    %v300 = vadd.f32 %v298, %v299
    %v301 = vsel %vm265, %v259, 0.0
    %v302 = vadd.f32 %v300, %v301
    %v303 = vsel %vm265, %v262, 0.0
    %v304 = vadd.f32 %v302, %v303
    %v305 = vrot.slane %v304, 4
    %v306 = vadd.f32 %v304, %v305
    %v307 = vrot.slane %v306, 2
    %v308 = vadd.f32 %v306, %v307
    %v309 = vrot.slane %v308, 1
    %v310 = vadd.f32 %v308, %v309
    %vm311 = vcmask 516096
    %312 = vst.msk [vmem:[#allocation2] sm:$0x1] %vm311, %v310
    %v313 = vmul.f32 %v187, %v187
    %v314 = vmul.f32 %v190, %v190
    %v315 = vmul.f32 %v195, %v195
    %v316 = vmul.f32 %v198, %v198
    %v317 = vmul.f32 %v203, %v203
    %v318 = vmul.f32 %v206, %v206
    %v319 = vmul.f32 %v211, %v211
    %v320 = vmul.f32 %v214, %v214
    %v321 = vmul.f32 %v219, %v219
    %v322 = vmul.f32 %v222, %v222
    %v323 = vmul.f32 %v227, %v227
    %v324 = vmul.f32 %v230, %v230
    %v325 = vmul.f32 %v235, %v235
    %v326 = vmul.f32 %v238, %v238
    %v327 = vmul.f32 %v243, %v243
    %v328 = vmul.f32 %v246, %v246
    %v329 = vmul.f32 %v251, %v251
    %v330 = vmul.f32 %v254, %v254
    %v331 = vmul.f32 %v259, %v259
    %v332 = vmul.f32 %v262, %v262
    %v333 = vsel %vm265, %v313, 0.0
    %v334 = vsel %vm265, %v314, 0.0
    %v335 = vadd.f32 %v333, %v334
    %v336 = vsel %vm265, %v315, 0.0
    %v337 = vadd.f32 %v335, %v336
    %v338 = vsel %vm265, %v316, 0.0
    %v339 = vadd.f32 %v337, %v338
    %v340 = vsel %vm265, %v317, 0.0
    %v341 = vadd.f32 %v339, %v340
    %v342 = vsel %vm265, %v318, 0.0
    %v343 = vadd.f32 %v341, %v342
    %v344 = vsel %vm265, %v319, 0.0
    %v345 = vadd.f32 %v343, %v344
    %v346 = vsel %vm265, %v320, 0.0
    %v347 = vadd.f32 %v345, %v346
    %v348 = vsel %vm265, %v321, 0.0
    %v349 = vadd.f32 %v347, %v348
    %v350 = vsel %vm265, %v322, 0.0
    %v351 = vadd.f32 %v349, %v350
    %v352 = vsel %vm265, %v323, 0.0
    %v353 = vadd.f32 %v351, %v352
    %v354 = vsel %vm265, %v324, 0.0
    %v355 = vadd.f32 %v353, %v354
    %v356 = vsel %vm265, %v325, 0.0
    %v357 = vadd.f32 %v355, %v356
    %v358 = vsel %vm265, %v326, 0.0
    %v359 = vadd.f32 %v357, %v358
    %v360 = vsel %vm265, %v327, 0.0
    %v361 = vadd.f32 %v359, %v360
    %v362 = vsel %vm265, %v328, 0.0
    %v363 = vadd.f32 %v361, %v362
    %v364 = vsel %vm265, %v329, 0.0
    %v365 = vadd.f32 %v363, %v364
    %v366 = vsel %vm265, %v330, 0.0
    %v367 = vadd.f32 %v365, %v366
    %v368 = vsel %vm265, %v331, 0.0
    %v369 = vadd.f32 %v367, %v368
    %v370 = vsel %vm265, %v332, 0.0
    %v371 = vadd.f32 %v369, %v370
    %v372 = vrot.slane %v371, 4
    %v373 = vadd.f32 %v371, %v372
    %v374 = vrot.slane %v373, 2
    %v375 = vadd.f32 %v373, %v374
    %v376 = vrot.slane %v375, 1
    %v377 = vadd.f32 %v375, %v376
    %378 = vst.msk [vmem:[#allocation4] sm:$0x1] %vm311, %v377
    %379 = vst.msk [vmem:[%s2] sm:$0xff] %vm265, %v187
    %380 = vst.msk [vmem:[%s2 + $0x8] sm:$0xff] %vm265, %v190
    %381 = vst.msk [vmem:[%s2 + $0x10] sm:$0xff] %vm265, %v195
    %382 = vst.msk [vmem:[%s2 + $0x18] sm:$0xff] %vm265, %v198
    %383 = vst.msk [vmem:[%s2 + $0x20] sm:$0xff] %vm265, %v203
    %384 = vst.msk [vmem:[%s2 + $0x28] sm:$0xff] %vm265, %v206
    %385 = vst.msk [vmem:[%s2 + $0x30] sm:$0xff] %vm265, %v211
    %386 = vst.msk [vmem:[%s2 + $0x38] sm:$0xff] %vm265, %v214
    %387 = vst.msk [vmem:[%s2 + $0x40] sm:$0xff] %vm265, %v219
    %388 = vst.msk [vmem:[%s2 + $0x48] sm:$0xff] %vm265, %v222
    %389 = vst.msk [vmem:[%s2 + $0x50] sm:$0xff] %vm265, %v227
    %390 = vst.msk [vmem:[%s2 + $0x58] sm:$0xff] %vm265, %v230
    %391 = vst.msk [vmem:[%s2 + $0x60] sm:$0xff] %vm265, %v235
    %392 = vst.msk [vmem:[%s2 + $0x68] sm:$0xff] %vm265, %v238
    %393 = vst.msk [vmem:[%s2 + $0x70] sm:$0xff] %vm265, %v243
    %394 = vst.msk [vmem:[%s2 + $0x78] sm:$0xff] %vm265, %v246
    %395 = vst.msk [vmem:[%s2 + $0x80] sm:$0xff] %vm265, %v251
    %396 = vst.msk [vmem:[%s2 + $0x88] sm:$0xff] %vm265, %v254
    %397 = vst.msk [vmem:[%s2 + $0x90] sm:$0xff] %vm265, %v259
    %398 = vst.msk [vmem:[%s2 + $0x98] sm:$0xff] %vm265, %v262
    // Predicated region
    $region10: #{_conv1d.1} parent=1 // pred_check
      _
    $region11: #{_conv1d.1} parent=1 // pred_check_branch
      %400 = sbr.rel (0) target = $region13
    $region12: #{_conv1d.1} parent=1 // pred_region
      _
    $region13: #{_conv1d.1} parent=1 // pred_fallthru
      _
    // Predicated region
    $region14: #{_conv1d.1} parent=1 // pred_check
      _
    $region15: #{_conv1d.1} parent=1 // pred_check_branch
      %402 = sbr.rel (0) target = $region17
    $region16: #{_conv1d.1} parent=1 // pred_region
      %s404 = ssub.s32 16, 16
      %405 = vsyncadd [#allocation3], %s404
      %s407 = sshll.u32 [#allocation2], 4
      %s408 = int_to_ptr.vmem [resolvable:$true] %s407
      %410 = dma.vmem_to_hbm [thread:$0]  %s408, 16, %s3, [#allocation3]
    $region17: #{_conv1d.1} parent=1 // pred_fallthru
      _
    // Predicated region
    $region18: #{_conv1d.1} parent=1 // pred_check
      _
    $region19: #{_conv1d.1} parent=1 // pred_check_branch
      %412 = sbr.rel (0) target = $region21
    $region20: #{_conv1d.1} parent=1 // pred_region
      %s414 = ssub.s32 16, 16
      %415 = vsyncadd [#allocation5], %s414
      %s417 = sshll.u32 [#allocation4], 4
      %s418 = int_to_ptr.vmem [resolvable:$true] %s417
      %420 = dma.vmem_to_hbm [thread:$0]  %s418, 16, %s4, [#allocation5]
    $region21: #{_conv1d.1} parent=1 // pred_fallthru
      _
    // Predicated region
    $region22: #{_conv1d.1} parent=1 // pred_check
      _
    $region23: #{_conv1d.1} parent=1 // pred_check_branch
      %422 = sbr.rel (0) target = $region25
    $region24: #{_conv1d.1} parent=1 // pred_region
      _
    $region25: #{_conv1d.1} parent=1 // pred_fallthru
      _
    // Predicated region
    $region26: #{_conv1d.1} parent=1 // pred_check
      _
    $region27: #{_conv1d.1} parent=1 // pred_check_branch
      %424 = sbr.rel (0) target = $region29
    $region28: #{_conv1d.1} parent=1 // pred_region
      %425 = dma.done [#allocation3], 16
    $region29: #{_conv1d.1} parent=1 // pred_fallthru
      _
    // Predicated region
    $region30: #{_conv1d.1} parent=1 // pred_check
      _
    $region31: #{_conv1d.1} parent=1 // pred_check_branch
      %427 = sbr.rel (0) target = $region33
    $region32: #{_conv1d.1} parent=1 // pred_region
      %428 = dma.done [#allocation5], 16
    $region33: #{_conv1d.1} parent=1 // pred_fallthru
      _
    %429 = vsyncpa [#allocation3], 1
    %430 = vsyncpa [#allocation5], 1

</llo_original>
